<compile_context>
chip_gen: v5e
topology: v5e:2x2
jax: 0.10.0
libtpu: 0.0.40
codegen_flags: <defaults>
</compile_context>

<pallas_src>
import functools

import jax
import jax.numpy as jnp
from jax.experimental import pallas as pl
from jax.experimental.pallas import tpu as pltpu

EPS = 1e-5
HIDDEN = 512
LANE = 128


def _round_up(x, m):
    return (x + m - 1) // m * m


def _horizon_embedder_kernel(x_ref, w1_ref, w2_ref, p1_ref, p2_ref, o_ref):
    n = x_ref.shape[0]
    inv_n = 1.0 / n

    # ---- Linear(input_dim, 512); bias omitted (cancelled by BN batch-mean subtraction) ----
    x = x_ref[...].astype(jnp.bfloat16)
    h = jnp.dot(x, w1_ref[...], preferred_element_type=jnp.float32)

    # ---- BatchNorm1d(512), training mode: one-pass batch stats + folded affine, then ReLU ----
    p1 = p1_ref[...]                      # (8, 512): row0 = gamma, row1 = beta
    mean1 = jnp.sum(h, axis=0, keepdims=True) * inv_n
    msq1 = jnp.sum(h * h, axis=0, keepdims=True) * inv_n
    var1 = jnp.maximum(msq1 - mean1 * mean1, 0.0)
    scale1 = p1[0:1, :] * jax.lax.rsqrt(var1 + EPS)
    shift1 = p1[1:2, :] - mean1 * scale1
    h = jnp.maximum(h * scale1 + shift1, 0.0)

    # ---- Linear(512, output_dim_padded) ----
    y = jnp.dot(h.astype(jnp.bfloat16), w2_ref[...], preferred_element_type=jnp.float32)

    # ---- BatchNorm1d(output_dim), training mode + ReLU ----
    p2 = p2_ref[...]                      # (8, out_pad): row0 = gamma, row1 = beta
    mean2 = jnp.sum(y, axis=0, keepdims=True) * inv_n
    msq2 = jnp.sum(y * y, axis=0, keepdims=True) * inv_n
    var2 = jnp.maximum(msq2 - mean2 * mean2, 0.0)
    scale2 = p2[0:1, :] * jax.lax.rsqrt(var2 + EPS)
    shift2 = p2[1:2, :] - mean2 * scale2
    o_ref[...] = jnp.maximum(y * scale2 + shift2, 0.0).astype(o_ref.dtype)


@functools.partial(jax.jit, static_argnames=("output_dim",))
def horizon_embedder(x, w1, w2, p1, p2, *, output_dim):
    """x: [N, input_dim] f32. w1/w2: padded bf16 weights. p1/p2: packed (8,C) gamma/beta slabs."""
    n, input_dim = x.shape
    in_pad = w1.shape[0]
    out_pad = w2.shape[1]
    if input_dim != in_pad:                       # lane-pad features with zeros (no effect on dot)
        x = jnp.pad(x, ((0, 0), (0, in_pad - input_dim)))

    full = lambda shape: pl.BlockSpec(shape, lambda i: (0,) * len(shape))

    out = pl.pallas_call(
        _horizon_embedder_kernel,
        out_shape=jax.ShapeDtypeStruct((n, out_pad), jnp.float32),
        grid=(1,),
        in_specs=[
            full((n, in_pad)),          # x (f32)
            full((in_pad, HIDDEN)),     # w1 (bf16, zero-padded rows)
            full((HIDDEN, out_pad)),    # w2 (bf16, zero-padded cols)
            full((8, HIDDEN)),          # packed gamma1/beta1
            full((8, out_pad)),         # packed gamma2/beta2
        ],
        out_specs=full((n, out_pad)),
        compiler_params=pltpu.CompilerParams(dimension_semantics=("arbitrary",)),
    )(x, w1, w2, p1, p2)
    return out[:, :output_dim]


def init_params(key, input_dim, output_dim):
    """PyTorch-style synthetic init (uniform fan-in bounds). Weights stored [in, out]."""
    k1, k2, k3, k4 = jax.random.split(key, 4)
    b1 = 1.0 / jnp.sqrt(input_dim)
    b2 = 1.0 / jnp.sqrt(HIDDEN)
    return {
        "w1": jax.random.uniform(k1, (input_dim, HIDDEN), jnp.float32, -b1, b1),
        "b1": jax.random.uniform(k2, (HIDDEN,), jnp.float32, -b1, b1),
        "g1": jnp.ones((HIDDEN,), jnp.float32),
        "be1": jnp.zeros((HIDDEN,), jnp.float32),
        "w2": jax.random.uniform(k3, (HIDDEN, output_dim), jnp.float32, -b2, b2),
        "b2": jax.random.uniform(k4, (output_dim,), jnp.float32, -b2, b2),
        "g2": jnp.ones((output_dim,), jnp.float32),
        "be2": jnp.zeros((output_dim,), jnp.float32),
    }


def prepare_params(params, input_dim, output_dim):
    """One-time packing/padding of parameters into the kernel layout."""
    in_pad = _round_up(input_dim, LANE)
    out_pad = _round_up(output_dim, LANE)
    w1 = jnp.zeros((in_pad, HIDDEN), jnp.bfloat16).at[:input_dim, :].set(
        params["w1"].astype(jnp.bfloat16))
    w2 = jnp.zeros((HIDDEN, out_pad), jnp.bfloat16).at[:, :output_dim].set(
        params["w2"].astype(jnp.bfloat16))
    p1 = jnp.zeros((8, HIDDEN), jnp.float32).at[0, :].set(params["g1"]).at[1, :].set(params["be1"])
    p2 = (jnp.zeros((8, out_pad), jnp.float32)
          .at[0, :output_dim].set(params["g2"])
          .at[1, :output_dim].set(params["be2"]))
    return w1, w2, p1, p2


def _reference_f32(x, p):
    """Full-f32 PyTorch training-mode semantics (biases included)."""
    h = x @ p["w1"] + p["b1"]
    m = h.mean(0, keepdims=True)
    v = ((h - m) ** 2).mean(0, keepdims=True)
    h = jnp.maximum((h - m) / jnp.sqrt(v + EPS) * p["g1"] + p["be1"], 0.0)
    y = h @ p["w2"] + p["b2"]
    m2 = y.mean(0, keepdims=True)
    v2 = ((y - m2) ** 2).mean(0, keepdims=True)
    return jnp.maximum((y - m2) / jnp.sqrt(v2 + EPS) * p["g2"] + p["be2"], 0.0)


def _reference_matched(x, p):
    """Pure-JAX mirror of the kernel math (bf16 dot operands, no bias, one-pass var, folded BN)."""
    bf = jnp.bfloat16
    h = jnp.dot(x.astype(bf), p["w1"].astype(bf), preferred_element_type=jnp.float32)
    m = jnp.mean(h, axis=0, keepdims=True)
    v = jnp.maximum(jnp.mean(h * h, axis=0, keepdims=True) - m * m, 0.0)
    s = p["g1"] * jax.lax.rsqrt(v + EPS)
    h = jnp.maximum(h * s + (p["be1"] - m * s), 0.0)
    y = jnp.dot(h.astype(bf), p["w2"].astype(bf), preferred_element_type=jnp.float32)
    m2 = jnp.mean(y, axis=0, keepdims=True)
    v2 = jnp.maximum(jnp.mean(y * y, axis=0, keepdims=True) - m2 * m2, 0.0)
    s2 = p["g2"] * jax.lax.rsqrt(v2 + EPS)
    return jnp.maximum(y * s2 + (p["be2"] - m2 * s2), 0.0)


if __name__ == "__main__":
    input_dim, output_dim, batch = 32, 64, 8

    key = jax.random.PRNGKey(0)
    kx, kp = jax.random.split(key)
    x = jax.random.normal(kx, (batch, input_dim), jnp.float32)
    params = init_params(kp, input_dim, output_dim)
    w1, w2, p1, p2 = prepare_params(params, input_dim, output_dim)

    out = horizon_embedder(x, w1, w2, p1, p2, output_dim=output_dim)
    out = jax.block_until_ready(out)
    assert out.shape == (batch, output_dim)

    # Tight check against a reference that mirrors the kernel's math exactly.
    ref_m = _reference_matched(x, params)
    assert jnp.allclose(out, ref_m, atol=2e-3, rtol=2e-3), float(jnp.max(jnp.abs(out - ref_m)))

    # Loose parity check against full-f32 PyTorch training-mode semantics (bf16 weights).
    ref = _reference_f32(x, params)
    assert float(jnp.max(jnp.abs(out - ref))) < 0.1

    print("KERNEL_OK")
</pallas_src>

<mosaic_0001>
module attributes {stable_mosaic.version = 11 : i64} {
  func.func @_horizon_embedder_kernel(%arg0: i32, %arg1: memref<8x128xf32, #tpu.memory_space<vmem>>, %arg2: memref<128x512xbf16, #tpu.memory_space<vmem>>, %arg3: memref<512x128xbf16, #tpu.memory_space<vmem>>, %arg4: memref<8x512xf32, #tpu.memory_space<vmem>>, %arg5: memref<8x128xf32, #tpu.memory_space<vmem>>, %arg6: memref<8x128xf32, #tpu.memory_space<vmem>>) attributes {dimension_semantics = [#tpu.dimension_semantics<arbitrary>], iteration_bounds = array<i64: 1>, scalar_prefetch = 0 : i64, scratch_operands = 0 : i64, tpu.core_type = #tpu.core_type<tc>, window_params = [{pipeline_mode = #tpu.pipeline_mode<synchronous>, transform_indices = @transform_0, window_bounds = array<i64: 8, 128>}, {pipeline_mode = #tpu.pipeline_mode<synchronous>, transform_indices = @transform_1, window_bounds = array<i64: 128, 512>}, {pipeline_mode = #tpu.pipeline_mode<synchronous>, transform_indices = @transform_2, window_bounds = array<i64: 512, 128>}, {pipeline_mode = #tpu.pipeline_mode<synchronous>, transform_indices = @transform_3, window_bounds = array<i64: 8, 512>}, {pipeline_mode = #tpu.pipeline_mode<synchronous>, transform_indices = @transform_4, window_bounds = array<i64: 8, 128>}, {pipeline_mode = #tpu.pipeline_mode<synchronous>, transform_indices = @transform_5, window_bounds = array<i64: 8, 128>}]} {
    %c0 = arith.constant 0 : index
    %c0_0 = arith.constant 0 : index
    %0 = vector.load %arg1[%c0, %c0_0] : memref<8x128xf32, #tpu.memory_space<vmem>>, vector<8x128xf32>
    %1 = arith.truncf %0 : vector<8x128xf32> to vector<8x128xbf16>
    %c0_1 = arith.constant 0 : index
    %c0_2 = arith.constant 0 : index
    %2 = vector.load %arg2[%c0_1, %c0_2] : memref<128x512xbf16, #tpu.memory_space<vmem>>, vector<128x512xbf16>
    %cst = arith.constant dense<0.000000e+00> : vector<8x512xf32>
    %3 = tpu.matmul %1, %2, %cst {dimension_numbers = #tpu.dot_dimension_numbers<[1], [0], [0], [1], [0, 0, 1, 1], [], []>} : vector<8x128xbf16>, vector<128x512xbf16>, vector<8x512xf32> -> vector<8x512xf32>
    %c0_3 = arith.constant 0 : index
    %c0_4 = arith.constant 0 : index
    %4 = vector.load %arg4[%c0_3, %c0_4] : memref<8x512xf32, #tpu.memory_space<vmem>>, vector<8x512xf32>
    %cst_5 = arith.constant dense<0.000000e+00> : vector<512xf32>
    %5 = vector.multi_reduction <add>, %3, %cst_5 [0] : vector<8x512xf32> to vector<512xf32>
    %6 = vector.shape_cast %5 : vector<512xf32> to vector<1x512xf32>
    %cst_6 = arith.constant 1.250000e-01 : f32
    %7 = vector.broadcast %cst_6 : f32 to vector<1x512xf32>
    %8 = arith.mulf %6, %7 : vector<1x512xf32>
    %9 = arith.mulf %3, %3 : vector<8x512xf32>
    %cst_7 = arith.constant dense<0.000000e+00> : vector<512xf32>
    %10 = vector.multi_reduction <add>, %9, %cst_7 [0] : vector<8x512xf32> to vector<512xf32>
    %11 = vector.shape_cast %10 : vector<512xf32> to vector<1x512xf32>
    %cst_8 = arith.constant 1.250000e-01 : f32
    %12 = vector.broadcast %cst_8 : f32 to vector<1x512xf32>
    %13 = arith.mulf %11, %12 : vector<1x512xf32>
    %14 = arith.mulf %8, %8 : vector<1x512xf32>
    %15 = arith.subf %13, %14 : vector<1x512xf32>
    %cst_9 = arith.constant 0.000000e+00 : f32
    %16 = vector.broadcast %cst_9 : f32 to vector<1x512xf32>
    %17 = arith.maximumf %15, %16 : vector<1x512xf32>
    %18 = vector.extract_strided_slice %4 {offsets = [0, 0], sizes = [1, 512], strides = [1, 1]} : vector<8x512xf32> to vector<1x512xf32>
    %cst_10 = arith.constant 9.99999974E-6 : f32
    %19 = vector.broadcast %cst_10 : f32 to vector<1x512xf32>
    %20 = arith.addf %17, %19 : vector<1x512xf32>
    %21 = math.rsqrt %20 : vector<1x512xf32>
    %22 = arith.mulf %18, %21 : vector<1x512xf32>
    %23 = vector.extract_strided_slice %4 {offsets = [1, 0], sizes = [1, 512], strides = [1, 1]} : vector<8x512xf32> to vector<1x512xf32>
    %24 = arith.mulf %8, %22 : vector<1x512xf32>
    %25 = arith.subf %23, %24 : vector<1x512xf32>
    %26 = vector.broadcast %22 : vector<1x512xf32> to vector<8x512xf32>
    %27 = arith.mulf %3, %26 : vector<8x512xf32>
    %28 = vector.broadcast %25 : vector<1x512xf32> to vector<8x512xf32>
    %29 = arith.addf %27, %28 : vector<8x512xf32>
    %cst_11 = arith.constant 0.000000e+00 : f32
    %30 = vector.broadcast %cst_11 : f32 to vector<8x512xf32>
    %31 = arith.maximumf %29, %30 : vector<8x512xf32>
    %32 = arith.truncf %31 : vector<8x512xf32> to vector<8x512xbf16>
    %c0_12 = arith.constant 0 : index
    %c0_13 = arith.constant 0 : index
    %33 = vector.load %arg3[%c0_12, %c0_13] : memref<512x128xbf16, #tpu.memory_space<vmem>>, vector<512x128xbf16>
    %cst_14 = arith.constant dense<0.000000e+00> : vector<8x128xf32>
    %34 = tpu.matmul %32, %33, %cst_14 {dimension_numbers = #tpu.dot_dimension_numbers<[1], [0], [0], [1], [0, 0, 1, 1], [], []>} : vector<8x512xbf16>, vector<512x128xbf16>, vector<8x128xf32> -> vector<8x128xf32>
    %c0_15 = arith.constant 0 : index
    %c0_16 = arith.constant 0 : index
    %35 = vector.load %arg5[%c0_15, %c0_16] : memref<8x128xf32, #tpu.memory_space<vmem>>, vector<8x128xf32>
    %cst_17 = arith.constant dense<0.000000e+00> : vector<128xf32>
    %36 = vector.multi_reduction <add>, %34, %cst_17 [0] : vector<8x128xf32> to vector<128xf32>
    %37 = vector.shape_cast %36 : vector<128xf32> to vector<1x128xf32>
    %cst_18 = arith.constant 1.250000e-01 : f32
    %38 = vector.broadcast %cst_18 : f32 to vector<1x128xf32>
    %39 = arith.mulf %37, %38 : vector<1x128xf32>
    %40 = arith.mulf %34, %34 : vector<8x128xf32>
    %cst_19 = arith.constant dense<0.000000e+00> : vector<128xf32>
    %41 = vector.multi_reduction <add>, %40, %cst_19 [0] : vector<8x128xf32> to vector<128xf32>
    %42 = vector.shape_cast %41 : vector<128xf32> to vector<1x128xf32>
    %cst_20 = arith.constant 1.250000e-01 : f32
    %43 = vector.broadcast %cst_20 : f32 to vector<1x128xf32>
    %44 = arith.mulf %42, %43 : vector<1x128xf32>
    %45 = arith.mulf %39, %39 : vector<1x128xf32>
    %46 = arith.subf %44, %45 : vector<1x128xf32>
    %cst_21 = arith.constant 0.000000e+00 : f32
    %47 = vector.broadcast %cst_21 : f32 to vector<1x128xf32>
    %48 = arith.maximumf %46, %47 : vector<1x128xf32>
    %49 = vector.extract_strided_slice %35 {offsets = [0, 0], sizes = [1, 128], strides = [1, 1]} : vector<8x128xf32> to vector<1x128xf32>
    %cst_22 = arith.constant 9.99999974E-6 : f32
    %50 = vector.broadcast %cst_22 : f32 to vector<1x128xf32>
    %51 = arith.addf %48, %50 : vector<1x128xf32>
    %52 = math.rsqrt %51 : vector<1x128xf32>
    %53 = arith.mulf %49, %52 : vector<1x128xf32>
    %54 = vector.extract_strided_slice %35 {offsets = [1, 0], sizes = [1, 128], strides = [1, 1]} : vector<8x128xf32> to vector<1x128xf32>
    %55 = arith.mulf %39, %53 : vector<1x128xf32>
    %56 = arith.subf %54, %55 : vector<1x128xf32>
    %57 = vector.broadcast %53 : vector<1x128xf32> to vector<8x128xf32>
    %58 = arith.mulf %34, %57 : vector<8x128xf32>
    %59 = vector.broadcast %56 : vector<1x128xf32> to vector<8x128xf32>
    %60 = arith.addf %58, %59 : vector<8x128xf32>
    %cst_23 = arith.constant 0.000000e+00 : f32
    %61 = vector.broadcast %cst_23 : f32 to vector<8x128xf32>
    %62 = arith.maximumf %60, %61 : vector<8x128xf32>
    %c0_24 = arith.constant 0 : index
    %c0_25 = arith.constant 0 : index
    %63 = vector.load %arg6[%c0_24, %c0_25] : memref<8x128xf32, #tpu.memory_space<vmem>>, vector<8x128xf32>
    tpu.vector_store %arg6[%c0_24, %c0_25], %62 {strides = array<i32>} : memref<8x128xf32, #tpu.memory_space<vmem>>, vector<8x128xf32>,
    return
  }
  func.func @transform_0(%arg0: i32) -> (i32, i32) {
    %c0_i32 = arith.constant 0 : i32
    %c0_i32_0 = arith.constant 0 : i32
    %c0_i32_1 = arith.constant 0 : i32
    return %c0_i32, %c0_i32_0 : i32, i32
  }
  func.func @transform_1(%arg0: i32) -> (i32, i32) {
    %c0_i32 = arith.constant 0 : i32
    %c0_i32_0 = arith.constant 0 : i32
    %c0_i32_1 = arith.constant 0 : i32
    return %c0_i32, %c0_i32_0 : i32, i32
  }
  func.func @transform_2(%arg0: i32) -> (i32, i32) {
    %c0_i32 = arith.constant 0 : i32
    %c0_i32_0 = arith.constant 0 : i32
    %c0_i32_1 = arith.constant 0 : i32
    return %c0_i32, %c0_i32_0 : i32, i32
  }
  func.func @transform_3(%arg0: i32) -> (i32, i32) {
    %c0_i32 = arith.constant 0 : i32
    %c0_i32_0 = arith.constant 0 : i32
    %c0_i32_1 = arith.constant 0 : i32
    return %c0_i32, %c0_i32_0 : i32, i32
  }
  func.func @transform_4(%arg0: i32) -> (i32, i32) {
    %c0_i32 = arith.constant 0 : i32
    %c0_i32_0 = arith.constant 0 : i32
    %c0_i32_1 = arith.constant 0 : i32
    return %c0_i32, %c0_i32_0 : i32, i32
  }
  func.func @transform_5(%arg0: i32) -> (i32, i32) {
    %c0_i32 = arith.constant 0 : i32
    %c0_i32_0 = arith.constant 0 : i32
    %c0_i32_1 = arith.constant 0 : i32
    return %c0_i32, %c0_i32_0 : i32, i32
  }
}

</mosaic_0001>

<llo_original>
// kernel: horizon_embedder.1
$region0: #{horizon_embedder.1}
  #allocation0 [shape = 'u32[]', space=smem, size = 0x4, offset = 0x4, fixed_abs, tag = 'smem constant byte address 0x4 - core index']
  #allocation1 [shape = 'u32[72,128]{1,0:T(1,128)}', space=vmem, size = 0x9000, scoped, tag = 'internal scratch']
  %s0 = inlined_call_operand.vmem [shape: f32[8,128], index: 0, kind: input, shape index: {}]
  %s1 = inlined_call_operand.hbm [shape: bf16[128,512], index: 1, kind: input, shape index: {}]
  %s2 = inlined_call_operand.hbm [shape: bf16[512,128], index: 2, kind: input, shape index: {}]
  %s3 = inlined_call_operand.hbm [shape: f32[8,512], index: 3, kind: input, shape index: {}]
  %s4 = inlined_call_operand.vmem [shape: f32[8,128], index: 4, kind: input, shape index: {}]
  %s5 = inlined_call_operand.hbm [shape: f32[8,128], index: 5, kind: output, shape index: {}]
  %s6 = sld [smem:[#allocation0]]
  $region42: #{horizon_embedder.1} parent=0
    _
  %s8 = ssub.s32 1, %s6
  %s9 = scalar_select 0, %s8, %s6
  $region1: #{horizon_embedder.1} parent=0
    #allocation2 [shape = 'u8[131072]{0}', space=vmem, size = 0x20000, scoped, tag = 'input window, operand 1, single buffered']
    #allocation3 [shape = 's32[1]{0}', space=sflag, size = 0x4, scoped, tag = 'scoped memory for horizon_embedder.1']
    #allocation4 [shape = 's32[1]{0}', space=sflag, size = 0x4, scoped, tag = 'scoped memory for horizon_embedder.1']
    #allocation5 [shape = 'u8[131072]{0}', space=vmem, size = 0x20000, scoped, tag = 'input window, operand 2, single buffered']
    #allocation6 [shape = 's32[1]{0}', space=sflag, size = 0x4, scoped, tag = 'scoped memory for horizon_embedder.1']
    #allocation7 [shape = 'u8[16384]{0}', space=vmem, size = 0x4000, scoped, tag = 'input window, operand 3, single buffered']
    #allocation8 [shape = 'u8[4096]{0}', space=vmem, size = 0x1000, scoped, tag = 'output window, operand 0, single buffered']
    %10 = vsyncpa [#allocation3], 0
    %11 = vsyncpa [#allocation6], 0
    %12 = vsyncpa [#allocation4], 0
    // Predicated region
    $region2: #{horizon_embedder.1} parent=1 // pred_check
      _
    $region3: #{horizon_embedder.1} parent=1 // pred_check_branch
      %14 = sbr.rel (0) target = $region5
    $region4: #{horizon_embedder.1} parent=1 // pred_region
      _
    $region5: #{horizon_embedder.1} parent=1 // pred_fallthru
      _
    // Predicated region
    $region6: #{horizon_embedder.1} parent=1 // pred_check
      _
    $region7: #{horizon_embedder.1} parent=1 // pred_check_branch
      %16 = sbr.rel (0) target = $region9
    $region8: #{horizon_embedder.1} parent=1 // pred_region
      %18 = vsyncadd [#allocation3], 0
      %s19 = sshll.u32 %s1, 4
      %s20 = int_to_ptr.hbm [resolvable:$true] %s19
      %s21 = sshll.u32 [#allocation2], 4
      %s22 = int_to_ptr.vmem [resolvable:$true] %s21
      %27 = dma.hbm_to_vmem [thread:$0]  %s20, 4096, %s22, [#allocation3], 256, 256, 16
    $region9: #{horizon_embedder.1} parent=1 // pred_fallthru
      _
    // Predicated region
    $region10: #{horizon_embedder.1} parent=1 // pred_check
      _
    $region11: #{horizon_embedder.1} parent=1 // pred_check_branch
      %29 = sbr.rel (0) target = $region13
    $region12: #{horizon_embedder.1} parent=1 // pred_region
      %31 = vsyncadd [#allocation6], 0
      %s32 = sshll.u32 %s2, 4
      %s33 = int_to_ptr.hbm [resolvable:$true] %s32
      %s34 = sshll.u32 [#allocation5], 4
      %s35 = int_to_ptr.vmem [resolvable:$true] %s34
      %40 = dma.hbm_to_vmem [thread:$0]  %s33, 4096, %s35, [#allocation6], 64, 64, 4
    $region13: #{horizon_embedder.1} parent=1 // pred_fallthru
      _
    // Predicated region
    $region14: #{horizon_embedder.1} parent=1 // pred_check
      _
    $region15: #{horizon_embedder.1} parent=1 // pred_check_branch
      %42 = sbr.rel (0) target = $region17
    $region16: #{horizon_embedder.1} parent=1 // pred_region
      %44 = vsyncadd [#allocation6], 0
      %s46 = sshll.u32 %s3, 4
      %s47 = int_to_ptr.hbm [resolvable:$true] %s46
      %s48 = sshll.u32 [#allocation7], 4
      %s49 = int_to_ptr.vmem [resolvable:$true] %s48
      %51 = dma.hbm_to_vmem [thread:$0]  %s47, 512, %s49, [#allocation6]
    $region17: #{horizon_embedder.1} parent=1 // pred_fallthru
      _
    // Predicated region
    $region18: #{horizon_embedder.1} parent=1 // pred_check
      _
    $region19: #{horizon_embedder.1} parent=1 // pred_check_branch
      %53 = sbr.rel (0) target = $region21
    $region20: #{horizon_embedder.1} parent=1 // pred_region
      _
    $region21: #{horizon_embedder.1} parent=1 // pred_fallthru
      _
    // Predicated region
    $region22: #{horizon_embedder.1} parent=1 // pred_check
      _
    $region23: #{horizon_embedder.1} parent=1 // pred_check_branch
      %55 = sbr.rel (0) target = $region25
    $region24: #{horizon_embedder.1} parent=1 // pred_region
      %57 = dma.done [#allocation3], 4096
    $region25: #{horizon_embedder.1} parent=1 // pred_fallthru
      _
    // Predicated region
    $region26: #{horizon_embedder.1} parent=1 // pred_check
      _
    $region27: #{horizon_embedder.1} parent=1 // pred_check_branch
      %59 = sbr.rel (0) target = $region29
    $region28: #{horizon_embedder.1} parent=1 // pred_region
      %61 = dma.done [#allocation6], 4096
    $region29: #{horizon_embedder.1} parent=1 // pred_fallthru
      _
    // Predicated region
    $region30: #{horizon_embedder.1} parent=1 // pred_check
      _
    $region31: #{horizon_embedder.1} parent=1 // pred_check_branch
      %63 = sbr.rel (0) target = $region33
    $region32: #{horizon_embedder.1} parent=1 // pred_region
      %65 = dma.done [#allocation6], 512
    $region33: #{horizon_embedder.1} parent=1 // pred_fallthru
      _
    %v66 = vld [vmem:[%s0] sm:$0xff]
    %v67 = vpack.c.bf16 %v66, %v66
    %v68 = vld [vmem:[#allocation2] sm:$0xff]
    %v69 = vld [vmem:[#allocation2 + $0x8] sm:$0xff]
    %v70 = vld [vmem:[#allocation2 + $0x10] sm:$0xff]
    %v71 = vld [vmem:[#allocation2 + $0x18] sm:$0xff]
    %v72 = vld [vmem:[#allocation2 + $0x20] sm:$0xff]
    %v73 = vld [vmem:[#allocation2 + $0x28] sm:$0xff]
    %v74 = vld [vmem:[#allocation2 + $0x30] sm:$0xff]
    %v75 = vld [vmem:[#allocation2 + $0x38] sm:$0xff]
    %v76 = vld [vmem:[#allocation2 + $0x40] sm:$0xff]
    %v77 = vld [vmem:[#allocation2 + $0x48] sm:$0xff]
    %v78 = vld [vmem:[#allocation2 + $0x50] sm:$0xff]
    %v79 = vld [vmem:[#allocation2 + $0x58] sm:$0xff]
    %v80 = vld [vmem:[#allocation2 + $0x60] sm:$0xff]
    %v81 = vld [vmem:[#allocation2 + $0x68] sm:$0xff]
    %v82 = vld [vmem:[#allocation2 + $0x70] sm:$0xff]
    %v83 = vld [vmem:[#allocation2 + $0x78] sm:$0xff]
    %v84 = vld [vmem:[#allocation2 + $0x80] sm:$0xff]
    %v85 = vld [vmem:[#allocation2 + $0x88] sm:$0xff]
    %v86 = vld [vmem:[#allocation2 + $0x90] sm:$0xff]
    %v87 = vld [vmem:[#allocation2 + $0x98] sm:$0xff]
    %v88 = vld [vmem:[#allocation2 + $0xa0] sm:$0xff]
    %v89 = vld [vmem:[#allocation2 + $0xa8] sm:$0xff]
    %v90 = vld [vmem:[#allocation2 + $0xb0] sm:$0xff]
    %v91 = vld [vmem:[#allocation2 + $0xb8] sm:$0xff]
    %v92 = vld [vmem:[#allocation2 + $0xc0] sm:$0xff]
    %v93 = vld [vmem:[#allocation2 + $0xc8] sm:$0xff]
    %v94 = vld [vmem:[#allocation2 + $0xd0] sm:$0xff]
    %v95 = vld [vmem:[#allocation2 + $0xd8] sm:$0xff]
    %v96 = vld [vmem:[#allocation2 + $0xe0] sm:$0xff]
    %v97 = vld [vmem:[#allocation2 + $0xe8] sm:$0xff]
    %v98 = vld [vmem:[#allocation2 + $0xf0] sm:$0xff]
    %v99 = vld [vmem:[#allocation2 + $0xf8] sm:$0xff]
    %v132 = vunpack.c.l.b16 %v68
    %v133 = vunpack.c.h.b16 %v68
    %v134 = vunpack.c.l.b16 %v69
    %v135 = vunpack.c.h.b16 %v69
    %v136 = vunpack.c.l.b16 %v70
    %v137 = vunpack.c.h.b16 %v70
    %v138 = vunpack.c.l.b16 %v71
    %v139 = vunpack.c.h.b16 %v71
    %v140 = vunpack.c.l.b16 %v72
    %v141 = vunpack.c.h.b16 %v72
    %v142 = vunpack.c.l.b16 %v73
    %v143 = vunpack.c.h.b16 %v73
    %v144 = vunpack.c.l.b16 %v74
    %v145 = vunpack.c.h.b16 %v74
    %v146 = vunpack.c.l.b16 %v75
    %v147 = vunpack.c.h.b16 %v75
    %v148 = vunpack.c.l.b16 %v76
    %v149 = vunpack.c.h.b16 %v76
    %v150 = vunpack.c.l.b16 %v77
    %v151 = vunpack.c.h.b16 %v77
    %v152 = vunpack.c.l.b16 %v78
    %v153 = vunpack.c.h.b16 %v78
    %v154 = vunpack.c.l.b16 %v79
    %v155 = vunpack.c.h.b16 %v79
    %v156 = vunpack.c.l.b16 %v80
    %v157 = vunpack.c.h.b16 %v80
    %v158 = vunpack.c.l.b16 %v81
    %v159 = vunpack.c.h.b16 %v81
    %v160 = vunpack.c.l.b16 %v82
    %v161 = vunpack.c.h.b16 %v82
    %v162 = vunpack.c.l.b16 %v83
    %v163 = vunpack.c.h.b16 %v83
    %v164 = vunpack.c.l.b16 %v84
    %v165 = vunpack.c.h.b16 %v84
    %v166 = vunpack.c.l.b16 %v85
    %v167 = vunpack.c.h.b16 %v85
    %v168 = vunpack.c.l.b16 %v86
    %v169 = vunpack.c.h.b16 %v86
    %v170 = vunpack.c.l.b16 %v87
    %v171 = vunpack.c.h.b16 %v87
    %v172 = vunpack.c.l.b16 %v88
    %v173 = vunpack.c.h.b16 %v88
    %v174 = vunpack.c.l.b16 %v89
    %v175 = vunpack.c.h.b16 %v89
    %v176 = vunpack.c.l.b16 %v90
    %v177 = vunpack.c.h.b16 %v90
    %v178 = vunpack.c.l.b16 %v91
    %v179 = vunpack.c.h.b16 %v91
    %v180 = vunpack.c.l.b16 %v92
    %v181 = vunpack.c.h.b16 %v92
    %v182 = vunpack.c.l.b16 %v93
    %v183 = vunpack.c.h.b16 %v93
    %v184 = vunpack.c.l.b16 %v94
    %v185 = vunpack.c.h.b16 %v94
    %v186 = vunpack.c.l.b16 %v95
    %v187 = vunpack.c.h.b16 %v95
    %v188 = vunpack.c.l.b16 %v96
    %v189 = vunpack.c.h.b16 %v96
    %v190 = vunpack.c.l.b16 %v97
    %v191 = vunpack.c.h.b16 %v97
    %v192 = vunpack.c.l.b16 %v98
    %v193 = vunpack.c.h.b16 %v98
    %v194 = vunpack.c.l.b16 %v99
    %v195 = vunpack.c.h.b16 %v99
    %v196 = vpack.c.b16 %v136, %v132
    %v197 = vpack.c.b16 %v137, %v133
    %v198 = vpack.c.b16 %v138, %v134
    %v199 = vpack.c.b16 %v139, %v135
    %v200 = vpack.c.b16 %v144, %v140
    %v201 = vpack.c.b16 %v145, %v141
    %v202 = vpack.c.b16 %v146, %v142
    %v203 = vpack.c.b16 %v147, %v143
    %v204 = vpack.c.b16 %v152, %v148
    %v205 = vpack.c.b16 %v153, %v149
    %v206 = vpack.c.b16 %v154, %v150
    %v207 = vpack.c.b16 %v155, %v151
    %v208 = vpack.c.b16 %v160, %v156
    %v209 = vpack.c.b16 %v161, %v157
    %v210 = vpack.c.b16 %v162, %v158
    %v211 = vpack.c.b16 %v163, %v159
    %v212 = vpack.c.b16 %v168, %v164
    %v213 = vpack.c.b16 %v169, %v165
    %v214 = vpack.c.b16 %v170, %v166
    %v215 = vpack.c.b16 %v171, %v167
    %v216 = vpack.c.b16 %v176, %v172
    %v217 = vpack.c.b16 %v177, %v173
    %v218 = vpack.c.b16 %v178, %v174
    %v219 = vpack.c.b16 %v179, %v175
    %v220 = vpack.c.b16 %v184, %v180
    %v221 = vpack.c.b16 %v185, %v181
    %v222 = vpack.c.b16 %v186, %v182
    %v223 = vpack.c.b16 %v187, %v183
    %v224 = vpack.c.b16 %v192, %v188
    %v225 = vpack.c.b16 %v193, %v189
    %v226 = vpack.c.b16 %v194, %v190
    %v227 = vpack.c.b16 %v195, %v191
    %260 = vmatpush.bf16.msra.mxu0 %v224
    %261 = vmatpush.bf16.msra.mxu0 %v220
    %262 = vmatpush.bf16.msra.mxu0 %v216
    %263 = vmatpush.bf16.msra.mxu0 %v212
    %264 = vmatpush.bf16.msra.mxu0 %v208
    %265 = vmatpush.bf16.msra.mxu0 %v204
    %266 = vmatpush.bf16.msra.mxu0 %v200
    %267 = vmatpush.bf16.msra.mxu0 %v196
    %268 = vmatmul.bf16.gmra.mxu0 %v67
    %v269 = vpop.f32.mrf.mxu0
    %v270 = vadd.f32 0.0, %v269
    %v271 = vpop.f32.mrf.mxu0
    %272 = vdwg.mxu0
    %273 = vmatpush.bf16.msra.mxu0 %v225
    %274 = vmatpush.bf16.msra.mxu0 %v221
    %275 = vmatpush.bf16.msra.mxu0 %v217
    %276 = vmatpush.bf16.msra.mxu0 %v213
    %277 = vmatpush.bf16.msra.mxu0 %v209
    %278 = vmatpush.bf16.msra.mxu0 %v205
    %279 = vmatpush.bf16.msra.mxu0 %v201
    %280 = vmatpush.bf16.msra.mxu0 %v197
    %281 = vmatmul.bf16.gmra.mxu0 %v67
    %v282 = vpop.f32.mrf.mxu0
    %v283 = vadd.f32 0.0, %v282
    %v284 = vpop.f32.mrf.mxu0
    %285 = vdwg.mxu0
    %286 = vmatpush.bf16.msra.mxu0 %v226
    %287 = vmatpush.bf16.msra.mxu0 %v222
    %288 = vmatpush.bf16.msra.mxu0 %v218
    %289 = vmatpush.bf16.msra.mxu0 %v214
    %290 = vmatpush.bf16.msra.mxu0 %v210
    %291 = vmatpush.bf16.msra.mxu0 %v206
    %292 = vmatpush.bf16.msra.mxu0 %v202
    %293 = vmatpush.bf16.msra.mxu0 %v198
    %294 = vmatmul.bf16.gmra.mxu0 %v67
    %v295 = vpop.f32.mrf.mxu0
    %v296 = vadd.f32 0.0, %v295
    %v297 = vpop.f32.mrf.mxu0
    %298 = vdwg.mxu0
    %299 = vmatpush.bf16.msra.mxu0 %v227
    %300 = vmatpush.bf16.msra.mxu0 %v223
    %301 = vmatpush.bf16.msra.mxu0 %v219
    %302 = vmatpush.bf16.msra.mxu0 %v215
    %303 = vmatpush.bf16.msra.mxu0 %v211
    %304 = vmatpush.bf16.msra.mxu0 %v207
    %305 = vmatpush.bf16.msra.mxu0 %v203
    %306 = vmatpush.bf16.msra.mxu0 %v199
    %307 = vmatmul.bf16.gmra.mxu0 %v67
    %v308 = vpop.f32.mrf.mxu0
    %v309 = vadd.f32 0.0, %v308
    %v310 = vpop.f32.mrf.mxu0
    %311 = vdwg.mxu0
    %v312 = vld [vmem:[#allocation7] sm:$0xff]
    %v313 = vld [vmem:[#allocation7 + $0x8] sm:$0xff]
    %v314 = vld [vmem:[#allocation7 + $0x10] sm:$0xff]
    %v315 = vld [vmem:[#allocation7 + $0x18] sm:$0xff]
    %v316 = vrot.slane %v270, 4
    %v317 = vadd.f32 %v270, %v316
    %v318 = vrot.slane %v317, 2
    %v319 = vadd.f32 %v317, %v318
    %v320 = vrot.slane %v319, 1
    %v321 = vadd.f32 %v319, %v320
    %v322 = vrot.slane %v283, 4
    %v323 = vadd.f32 %v283, %v322
    %v324 = vrot.slane %v323, 2
    %v325 = vadd.f32 %v323, %v324
    %v326 = vrot.slane %v325, 1
    %v327 = vadd.f32 %v325, %v326
    %v328 = vrot.slane %v296, 4
    %v329 = vadd.f32 %v296, %v328
    %v330 = vrot.slane %v329, 2
    %v331 = vadd.f32 %v329, %v330
    %v332 = vrot.slane %v331, 1
    %v333 = vadd.f32 %v331, %v332
    %v334 = vrot.slane %v309, 4
    %v335 = vadd.f32 %v309, %v334
    %v336 = vrot.slane %v335, 2
    %v337 = vadd.f32 %v335, %v336
    %v338 = vrot.slane %v337, 1
    %v339 = vadd.f32 %v337, %v338
    %v340 = vmul.f32 %v321, 0.125
    %v341 = vmul.f32 %v327, 0.125
    %v342 = vmul.f32 %v333, 0.125
    %v343 = vmul.f32 %v339, 0.125
    %v344 = vmul.f32 %v270, %v270
    %v345 = vmul.f32 %v283, %v283
    %v346 = vmul.f32 %v296, %v296
    %v347 = vmul.f32 %v309, %v309
    %v348 = vrot.slane %v344, 4
    %v349 = vadd.f32 %v344, %v348
    %v350 = vrot.slane %v349, 2
    %v351 = vadd.f32 %v349, %v350
    %v352 = vrot.slane %v351, 1
    %v353 = vadd.f32 %v351, %v352
    %v354 = vrot.slane %v345, 4
    %v355 = vadd.f32 %v345, %v354
    %v356 = vrot.slane %v355, 2
    %v357 = vadd.f32 %v355, %v356
    %v358 = vrot.slane %v357, 1
    %v359 = vadd.f32 %v357, %v358
    %v360 = vrot.slane %v346, 4
    %v361 = vadd.f32 %v346, %v360
    %v362 = vrot.slane %v361, 2
    %v363 = vadd.f32 %v361, %v362
    %v364 = vrot.slane %v363, 1
    %v365 = vadd.f32 %v363, %v364
    %v366 = vrot.slane %v347, 4
    %v367 = vadd.f32 %v347, %v366
    %v368 = vrot.slane %v367, 2
    %v369 = vadd.f32 %v367, %v368
    %v370 = vrot.slane %v369, 1
    %v371 = vadd.f32 %v369, %v370
    %v372 = vmul.f32 %v353, 0.125
    %v373 = vmul.f32 %v359, 0.125
    %v374 = vmul.f32 %v365, 0.125
    %v375 = vmul.f32 %v371, 0.125
    %v376 = vmul.f32 %v340, %v340
    %v377 = vmul.f32 %v341, %v341
    %v378 = vmul.f32 %v342, %v342
    %v379 = vmul.f32 %v343, %v343
    %v380 = vsub.f32 %v372, %v376
    %v381 = vsub.f32 %v373, %v377
    %v382 = vsub.f32 %v374, %v378
    %v383 = vsub.f32 %v375, %v379
    %v384 = vmax.f32 %v380, 0.0
    %v385 = vmax.f32 %v381, 0.0
    %v386 = vmax.f32 %v382, 0.0
    %v387 = vmax.f32 %v383, 0.0
    %v388 = vadd.f32 %v384, 1e-05
    %v389 = vadd.f32 %v385, 1e-05
    %v390 = vadd.f32 %v386, 1e-05
    %v391 = vadd.f32 %v387, 1e-05
    %v392 = vrsqrt.pop %v388
    %v393 = vmul.f32 %v392, %v388
    %v394 = vmul.f32 %v393, %v392
    %v395 = vmul.f32 0.5, %v394
    %v396 = vsub.f32 1.5, %v395
    %v397 = vmul.f32 %v392, %v396
    %vm398 = vweird.f32 %v388
    %vm399 = vweird.f32 %v392
    %vm400 = vmor %vm398, %vm399
    %v401 = vsel %vm400, %v392, %v397
    %v402 = vrsqrt.pop %v389
    %v403 = vmul.f32 %v402, %v389
    %v404 = vmul.f32 %v403, %v402
    %v405 = vmul.f32 0.5, %v404
    %v406 = vsub.f32 1.5, %v405
    %v407 = vmul.f32 %v402, %v406
    %vm408 = vweird.f32 %v389
    %vm409 = vweird.f32 %v402
    %vm410 = vmor %vm408, %vm409
    %v411 = vsel %vm410, %v402, %v407
    %v412 = vrsqrt.pop %v390
    %v413 = vmul.f32 %v412, %v390
    %v414 = vmul.f32 %v413, %v412
    %v415 = vmul.f32 0.5, %v414
    %v416 = vsub.f32 1.5, %v415
    %v417 = vmul.f32 %v412, %v416
    %vm418 = vweird.f32 %v390
    %vm419 = vweird.f32 %v412
    %vm420 = vmor %vm418, %vm419
    %v421 = vsel %vm420, %v412, %v417
    %v422 = vrsqrt.pop %v391
    %v423 = vmul.f32 %v422, %v391
    %v424 = vmul.f32 %v423, %v422
    %v425 = vmul.f32 0.5, %v424
    %v426 = vsub.f32 1.5, %v425
    %v427 = vmul.f32 %v422, %v426
    %vm428 = vweird.f32 %v391
    %vm429 = vweird.f32 %v422
    %vm430 = vmor %vm428, %vm429
    %v431 = vsel %vm430, %v422, %v427
    %v432 = vmul.f32 %v312, %v401
    %v433 = vmul.f32 %v313, %v411
    %v434 = vmul.f32 %v314, %v421
    %v435 = vmul.f32 %v315, %v431
    %v436 = vmul.f32 %v340, %v432
    %v437 = vmul.f32 %v341, %v433
    %v438 = vmul.f32 %v342, %v434
    %v439 = vmul.f32 %v343, %v435
    %v444 = vrot.slane %v436, 7
    %v445 = vrot.slane %v437, 7
    %v446 = vrot.slane %v438, 7
    %v447 = vrot.slane %v439, 7
    %v452 = vsub.f32 %v312, %v444
    %v453 = vsub.f32 %v313, %v445
    %v454 = vsub.f32 %v314, %v446
    %v455 = vsub.f32 %v315, %v447
    %v456 = vperm.slane %v432, 0
    %v457 = vperm.slane %v433, 0
    %v458 = vperm.slane %v434, 0
    %v459 = vperm.slane %v435, 0
    %v460 = vmul.f32 %v270, %v456
    %v461 = vmul.f32 %v283, %v457
    %v462 = vmul.f32 %v296, %v458
    %v463 = vmul.f32 %v309, %v459
    %v464 = vperm.slane %v452, 1
    %v465 = vperm.slane %v453, 1
    %v466 = vperm.slane %v454, 1
    %v467 = vperm.slane %v455, 1
    %v468 = vadd.f32 %v460, %v464
    %v469 = vadd.f32 %v461, %v465
    %v470 = vadd.f32 %v462, %v466
    %v471 = vadd.f32 %v463, %v467
    %v472 = vmax.f32 %v468, 0.0
    %v473 = vmax.f32 %v469, 0.0
    %v474 = vmax.f32 %v470, 0.0
    %v475 = vmax.f32 %v471, 0.0
    %v476 = vpack.c.bf16 %v472, %v472
    %v477 = vpack.c.bf16 %v473, %v473
    %v478 = vpack.c.bf16 %v474, %v474
    %v479 = vpack.c.bf16 %v475, %v475
    %v480 = vld [vmem:[#allocation5] sm:$0xf]
    %v481 = vld [vmem:[#allocation5 + $0x4] sm:$0xf]
    %v482 = vld [vmem:[#allocation5 + $0x8] sm:$0xf]
    %v483 = vld [vmem:[#allocation5 + $0xc] sm:$0xf]
    %v484 = vld [vmem:[#allocation5 + $0x10] sm:$0xf]
    %v485 = vld [vmem:[#allocation5 + $0x14] sm:$0xf]
    %v486 = vld [vmem:[#allocation5 + $0x18] sm:$0xf]
    %v487 = vld [vmem:[#allocation5 + $0x1c] sm:$0xf]
    %v488 = vld [vmem:[#allocation5 + $0x20] sm:$0xf]
    %v489 = vld [vmem:[#allocation5 + $0x24] sm:$0xf]
    %v490 = vld [vmem:[#allocation5 + $0x28] sm:$0xf]
    %v491 = vld [vmem:[#allocation5 + $0x2c] sm:$0xf]
    %v492 = vld [vmem:[#allocation5 + $0x30] sm:$0xf]
    %v493 = vld [vmem:[#allocation5 + $0x34] sm:$0xf]
    %v494 = vld [vmem:[#allocation5 + $0x38] sm:$0xf]
    %v495 = vld [vmem:[#allocation5 + $0x3c] sm:$0xf]
    %v496 = vld [vmem:[#allocation5 + $0x40] sm:$0xf]
    %v497 = vld [vmem:[#allocation5 + $0x44] sm:$0xf]
    %v498 = vld [vmem:[#allocation5 + $0x48] sm:$0xf]
    %v499 = vld [vmem:[#allocation5 + $0x4c] sm:$0xf]
    %v500 = vld [vmem:[#allocation5 + $0x50] sm:$0xf]
    %v501 = vld [vmem:[#allocation5 + $0x54] sm:$0xf]
    %v502 = vld [vmem:[#allocation5 + $0x58] sm:$0xf]
    %v503 = vld [vmem:[#allocation5 + $0x5c] sm:$0xf]
    %v504 = vld [vmem:[#allocation5 + $0x60] sm:$0xf]
    %v505 = vld [vmem:[#allocation5 + $0x64] sm:$0xf]
    %v506 = vld [vmem:[#allocation5 + $0x68] sm:$0xf]
    %v507 = vld [vmem:[#allocation5 + $0x6c] sm:$0xf]
    %v508 = vld [vmem:[#allocation5 + $0x70] sm:$0xf]
    %v509 = vld [vmem:[#allocation5 + $0x74] sm:$0xf]
    %v510 = vld [vmem:[#allocation5 + $0x78] sm:$0xf]
    %v511 = vld [vmem:[#allocation5 + $0x7c] sm:$0xf]
    %v512 = vld [vmem:[#allocation5 + $0x80] sm:$0xf]
    %v513 = vld [vmem:[#allocation5 + $0x84] sm:$0xf]
    %v514 = vld [vmem:[#allocation5 + $0x88] sm:$0xf]
    %v515 = vld [vmem:[#allocation5 + $0x8c] sm:$0xf]
    %v516 = vld [vmem:[#allocation5 + $0x90] sm:$0xf]
    %v517 = vld [vmem:[#allocation5 + $0x94] sm:$0xf]
    %v518 = vld [vmem:[#allocation5 + $0x98] sm:$0xf]
    %v519 = vld [vmem:[#allocation5 + $0x9c] sm:$0xf]
    %v520 = vld [vmem:[#allocation5 + $0xa0] sm:$0xf]
    %v521 = vld [vmem:[#allocation5 + $0xa4] sm:$0xf]
    %v522 = vld [vmem:[#allocation5 + $0xa8] sm:$0xf]
    %v523 = vld [vmem:[#allocation5 + $0xac] sm:$0xf]
    %v524 = vld [vmem:[#allocation5 + $0xb0] sm:$0xf]
    %v525 = vld [vmem:[#allocation5 + $0xb4] sm:$0xf]
    %v526 = vld [vmem:[#allocation5 + $0xb8] sm:$0xf]
    %v527 = vld [vmem:[#allocation5 + $0xbc] sm:$0xf]
    %v528 = vld [vmem:[#allocation5 + $0xc0] sm:$0xf]
    %v529 = vld [vmem:[#allocation5 + $0xc4] sm:$0xf]
    %v530 = vld [vmem:[#allocation5 + $0xc8] sm:$0xf]
    %v531 = vld [vmem:[#allocation5 + $0xcc] sm:$0xf]
    %v532 = vld [vmem:[#allocation5 + $0xd0] sm:$0xf]
    %v533 = vld [vmem:[#allocation5 + $0xd4] sm:$0xf]
    %v534 = vld [vmem:[#allocation5 + $0xd8] sm:$0xf]
    %v535 = vld [vmem:[#allocation5 + $0xdc] sm:$0xf]
    %v536 = vld [vmem:[#allocation5 + $0xe0] sm:$0xf]
    %v537 = vld [vmem:[#allocation5 + $0xe4] sm:$0xf]
    %v538 = vld [vmem:[#allocation5 + $0xe8] sm:$0xf]
    %v539 = vld [vmem:[#allocation5 + $0xec] sm:$0xf]
    %v540 = vld [vmem:[#allocation5 + $0xf0] sm:$0xf]
    %v541 = vld [vmem:[#allocation5 + $0xf4] sm:$0xf]
    %v542 = vld [vmem:[#allocation5 + $0xf8] sm:$0xf]
    %v543 = vld [vmem:[#allocation5 + $0xfc] sm:$0xf]
    %v608 = vunpack.c.l.b16 %v480
    %v609 = vunpack.c.l.b16 %v481
    %v610 = vunpack.c.l.b16 %v482
    %v611 = vunpack.c.l.b16 %v483
    %v612 = vunpack.c.l.b16 %v484
    %v613 = vunpack.c.l.b16 %v485
    %v614 = vunpack.c.l.b16 %v486
    %v615 = vunpack.c.l.b16 %v487
    %v616 = vunpack.c.l.b16 %v488
    %v617 = vunpack.c.l.b16 %v489
    %v618 = vunpack.c.l.b16 %v490
    %v619 = vunpack.c.l.b16 %v491
    %v620 = vunpack.c.l.b16 %v492
    %v621 = vunpack.c.l.b16 %v493
    %v622 = vunpack.c.l.b16 %v494
    %v623 = vunpack.c.l.b16 %v495
    %v624 = vunpack.c.l.b16 %v496
    %v625 = vunpack.c.l.b16 %v497
    %v626 = vunpack.c.l.b16 %v498
    %v627 = vunpack.c.l.b16 %v499
    %v628 = vunpack.c.l.b16 %v500
    %v629 = vunpack.c.l.b16 %v501
    %v630 = vunpack.c.l.b16 %v502
    %v631 = vunpack.c.l.b16 %v503
    %v632 = vunpack.c.l.b16 %v504
    %v633 = vunpack.c.l.b16 %v505
    %v634 = vunpack.c.l.b16 %v506
    %v635 = vunpack.c.l.b16 %v507
    %v636 = vunpack.c.l.b16 %v508
    %v637 = vunpack.c.l.b16 %v509
    %v638 = vunpack.c.l.b16 %v510
    %v639 = vunpack.c.l.b16 %v511
    %v640 = vunpack.c.l.b16 %v512
    %v641 = vunpack.c.l.b16 %v513
    %v642 = vunpack.c.l.b16 %v514
    %v643 = vunpack.c.l.b16 %v515
    %v644 = vunpack.c.l.b16 %v516
    %v645 = vunpack.c.l.b16 %v517
    %v646 = vunpack.c.l.b16 %v518
    %v647 = vunpack.c.l.b16 %v519
    %v648 = vunpack.c.l.b16 %v520
    %v649 = vunpack.c.l.b16 %v521
    %v650 = vunpack.c.l.b16 %v522
    %v651 = vunpack.c.l.b16 %v523
    %v652 = vunpack.c.l.b16 %v524
    %v653 = vunpack.c.l.b16 %v525
    %v654 = vunpack.c.l.b16 %v526
    %v655 = vunpack.c.l.b16 %v527
    %v656 = vunpack.c.l.b16 %v528
    %v657 = vunpack.c.l.b16 %v529
    %v658 = vunpack.c.l.b16 %v530
    %v659 = vunpack.c.l.b16 %v531
    %v660 = vunpack.c.l.b16 %v532
    %v661 = vunpack.c.l.b16 %v533
    %v662 = vunpack.c.l.b16 %v534
    %v663 = vunpack.c.l.b16 %v535
    %v664 = vunpack.c.l.b16 %v536
    %v665 = vunpack.c.l.b16 %v537
    %v666 = vunpack.c.l.b16 %v538
    %v667 = vunpack.c.l.b16 %v539
    %v668 = vunpack.c.l.b16 %v540
    %v669 = vunpack.c.l.b16 %v541
    %v670 = vunpack.c.l.b16 %v542
    %v671 = vunpack.c.l.b16 %v543
    %v672 = vpack.c.b16 %v609, %v608
    %v673 = vpack.c.b16 %v611, %v610
    %v674 = vpack.c.b16 %v613, %v612
    %v675 = vpack.c.b16 %v615, %v614
    %v676 = vpack.c.b16 %v617, %v616
    %v677 = vpack.c.b16 %v619, %v618
    %v678 = vpack.c.b16 %v621, %v620
    %v679 = vpack.c.b16 %v623, %v622
    %v680 = vpack.c.b16 %v625, %v624
    %v681 = vpack.c.b16 %v627, %v626
    %v682 = vpack.c.b16 %v629, %v628
    %v683 = vpack.c.b16 %v631, %v630
    %v684 = vpack.c.b16 %v633, %v632
    %v685 = vpack.c.b16 %v635, %v634
    %v686 = vpack.c.b16 %v637, %v636
    %v687 = vpack.c.b16 %v639, %v638
    %v688 = vpack.c.b16 %v641, %v640
    %v689 = vpack.c.b16 %v643, %v642
    %v690 = vpack.c.b16 %v645, %v644
    %v691 = vpack.c.b16 %v647, %v646
    %v692 = vpack.c.b16 %v649, %v648
    %v693 = vpack.c.b16 %v651, %v650
    %v694 = vpack.c.b16 %v653, %v652
    %v695 = vpack.c.b16 %v655, %v654
    %v696 = vpack.c.b16 %v657, %v656
    %v697 = vpack.c.b16 %v659, %v658
    %v698 = vpack.c.b16 %v661, %v660
    %v699 = vpack.c.b16 %v663, %v662
    %v700 = vpack.c.b16 %v665, %v664
    %v701 = vpack.c.b16 %v667, %v666
    %v702 = vpack.c.b16 %v669, %v668
    %v703 = vpack.c.b16 %v671, %v670
    %736 = vmatpush.bf16.msra.mxu0 %v679
    %737 = vmatpush.bf16.msra.mxu0 %v678
    %738 = vmatpush.bf16.msra.mxu0 %v677
    %739 = vmatpush.bf16.msra.mxu0 %v676
    %740 = vmatpush.bf16.msra.mxu0 %v675
    %741 = vmatpush.bf16.msra.mxu0 %v674
    %742 = vmatpush.bf16.msra.mxu0 %v673
    %743 = vmatpush.bf16.msra.mxu0 %v672
    %744 = vmatmul.bf16.gmra.mxu0 %v476
    %v745 = vpop.f32.mrf.mxu0
    %v746 = vadd.f32 0.0, %v745
    %v747 = vpop.f32.mrf.mxu0
    %748 = vdwg.mxu0
    %749 = vmatpush.bf16.msra.mxu0 %v687
    %750 = vmatpush.bf16.msra.mxu0 %v686
    %751 = vmatpush.bf16.msra.mxu0 %v685
    %752 = vmatpush.bf16.msra.mxu0 %v684
    %753 = vmatpush.bf16.msra.mxu0 %v683
    %754 = vmatpush.bf16.msra.mxu0 %v682
    %755 = vmatpush.bf16.msra.mxu0 %v681
    %756 = vmatpush.bf16.msra.mxu0 %v680
    %757 = vmatmul.bf16.gmra.mxu0 %v477
    %v758 = vpop.f32.mrf.mxu0
    %v759 = vadd.f32 %v746, %v758
    %v760 = vpop.f32.mrf.mxu0
    %761 = vdwg.mxu0
    %762 = vmatpush.bf16.msra.mxu0 %v695
    %763 = vmatpush.bf16.msra.mxu0 %v694
    %764 = vmatpush.bf16.msra.mxu0 %v693
    %765 = vmatpush.bf16.msra.mxu0 %v692
    %766 = vmatpush.bf16.msra.mxu0 %v691
    %767 = vmatpush.bf16.msra.mxu0 %v690
    %768 = vmatpush.bf16.msra.mxu0 %v689
    %769 = vmatpush.bf16.msra.mxu0 %v688
    %770 = vmatmul.bf16.gmra.mxu0 %v478
    %v771 = vpop.f32.mrf.mxu0
    %v772 = vadd.f32 %v759, %v771
    %v773 = vpop.f32.mrf.mxu0
    %774 = vdwg.mxu0
    %775 = vmatpush.bf16.msra.mxu0 %v703
    %776 = vmatpush.bf16.msra.mxu0 %v702
    %777 = vmatpush.bf16.msra.mxu0 %v701
    %778 = vmatpush.bf16.msra.mxu0 %v700
    %779 = vmatpush.bf16.msra.mxu0 %v699
    %780 = vmatpush.bf16.msra.mxu0 %v698
    %781 = vmatpush.bf16.msra.mxu0 %v697
    %782 = vmatpush.bf16.msra.mxu0 %v696
    %783 = vmatmul.bf16.gmra.mxu0 %v479
    %v784 = vpop.f32.mrf.mxu0
    %v785 = vadd.f32 %v772, %v784
    %v786 = vpop.f32.mrf.mxu0
    %787 = vdwg.mxu0
    %v788 = vld [vmem:[%s4] sm:$0xff]
    %v789 = vrot.slane %v785, 4
    %v790 = vadd.f32 %v785, %v789
    %v791 = vrot.slane %v790, 2
    %v792 = vadd.f32 %v790, %v791
    %v793 = vrot.slane %v792, 1
    %v794 = vadd.f32 %v792, %v793
    %v795 = vmul.f32 %v794, 0.125
    %v796 = vmul.f32 %v785, %v785
    %v797 = vrot.slane %v796, 4
    %v798 = vadd.f32 %v796, %v797
    %v799 = vrot.slane %v798, 2
    %v800 = vadd.f32 %v798, %v799
    %v801 = vrot.slane %v800, 1
    %v802 = vadd.f32 %v800, %v801
    %v803 = vmul.f32 %v802, 0.125
    %v804 = vmul.f32 %v795, %v795
    %v805 = vsub.f32 %v803, %v804
    %v806 = vmax.f32 %v805, 0.0
    %v807 = vadd.f32 %v806, 1e-05
    %v808 = vrsqrt.pop %v807
    %v809 = vmul.f32 %v808, %v807
    %v810 = vmul.f32 %v809, %v808
    %v811 = vmul.f32 0.5, %v810
    %v812 = vsub.f32 1.5, %v811
    %v813 = vmul.f32 %v808, %v812
    %vm814 = vweird.f32 %v807
    %vm815 = vweird.f32 %v808
    %vm816 = vmor %vm814, %vm815
    %v817 = vsel %vm816, %v808, %v813
    %v818 = vmul.f32 %v788, %v817
    %v819 = vmul.f32 %v795, %v818
    %v821 = vrot.slane %v819, 7
    %v823 = vsub.f32 %v788, %v821
    %v824 = vperm.slane %v818, 0
    %v825 = vmul.f32 %v785, %v824
    %v826 = vperm.slane %v823, 1
    %v827 = vadd.f32 %v825, %v826
    %v828 = vmax.f32 %v827, 0.0
    %829 = vst [vmem:[#allocation8] sm:$0xff] %v828
    // Predicated region
    $region34: #{horizon_embedder.1} parent=1 // pred_check
      _
    $region35: #{horizon_embedder.1} parent=1 // pred_check_branch
      %831 = sbr.rel (0) target = $region37
    $region36: #{horizon_embedder.1} parent=1 // pred_region
      %833 = vsyncadd [#allocation4], 0
      %s835 = sshll.u32 [#allocation8], 4
      %s836 = int_to_ptr.vmem [resolvable:$true] %s835
      %s837 = sshll.u32 %s5, 4
      %s838 = int_to_ptr.hbm [resolvable:$true] %s837
      %840 = dma.vmem_to_hbm [thread:$0]  %s836, 128, %s838, [#allocation4]
    $region37: #{horizon_embedder.1} parent=1 // pred_fallthru
      _
    // Predicated region
    $region38: #{horizon_embedder.1} parent=1 // pred_check
      _
    $region39: #{horizon_embedder.1} parent=1 // pred_check_branch
      %842 = sbr.rel (0) target = $region41
    $region40: #{horizon_embedder.1} parent=1 // pred_region
      %844 = dma.done [#allocation4], 128
    $region41: #{horizon_embedder.1} parent=1 // pred_fallthru
      _
    %845 = vsyncpa [#allocation3], 1
    %846 = vsyncpa [#allocation6], 1
    %847 = vsyncpa [#allocation4], 1

</llo_original>
